<compile_context>
chip_gen: v7x
topology: tpu7x:2x2x1
jax: 0.10.0
libtpu: 0.0.40
codegen_flags: <defaults>
</compile_context>

<pallas_src>
import functools

import jax
import jax.numpy as jnp
from jax.experimental import pallas as pl
from jax.experimental.pallas import tpu as pltpu

LANES = 128
CHUNK_ROWS = 512                 # inner-loop chunk (rows); multiple of 32
MAX_BLOCK_BYTES = 4 << 20        # per-input HBM->VMEM block target (4 MiB)
MIN_PALLAS_ELEMENTS = 1 << 16    # below this, plain XLA fusion wins


def _round_up(v, m):
    return ((v + m - 1) // m) * m


def _effectiveness_jax(x, y, *, alpha, beta, gamma, apply_non_lin):
    """Small-input fallback: identical math, plain XLA fusion."""
    x = x.astype(jnp.float32)
    y = y.astype(jnp.float32)
    if apply_non_lin:
        x = jax.nn.sigmoid(x)
    tp = jnp.sum(x * y)
    sum_x = jnp.sum(x)
    sum_y = jnp.sum(y)
    fp = sum_x - tp
    fn = sum_y - tp
    denom = (tp + alpha * fp) + beta * (tp + gamma * fn)
    return 1.0 - (1.0 + beta) * tp / denom


def _effectiveness_kernel(x_ref, y_ref, o_ref, xy_acc, x_acc, y_acc, *,
                          alpha, beta, gamma, apply_non_lin, chunk_rows,
                          valid_rows, mask_rows, sum_x_correction):
    i = pl.program_id(0)
    block_rows = x_ref.shape[0]
    n_chunks = block_rows // chunk_rows         # static
    row_base = i * block_rows                   # global row of this block

    @pl.when(i == 0)
    def _init():
        xy_acc[...] = jnp.zeros_like(xy_acc)
        x_acc[...] = jnp.zeros_like(x_acc)
        y_acc[...] = jnp.zeros_like(y_acc)

    if mask_rows:
        # Row-index iota hoisted out of the chunk loop (JAX does not CSE it).
        ridx = jax.lax.broadcasted_iota(jnp.int32, (chunk_rows, LANES), 0)

    def accumulate(x_raw, y_raw, row_start):
        x = x_raw.astype(jnp.float32)
        y = y_raw.astype(jnp.float32)
        if apply_non_lin:
            # sigmoid(x) = 0.5*tanh(0.5*x)+0.5: one EUP push + 2 VALU ops.
            x = 0.5 * jnp.tanh(0.5 * x) + 0.5
        if mask_rows:
            # Rows beyond the array hold unspecified data (possibly NaN), so
            # select (not multiply) them away.  Row indices stay far below
            # int32 range even for 2^31-element tensors.
            m = (row_start + ridx) < valid_rows
            x = jnp.where(m, x, 0.0)
            y = jnp.where(m, y, 0.0)
        # Fold into (8,128) vreg-shaped partials: pure VPU adds, no
        # cross-lane reduction in the steady state.
        xy_acc[...] += jnp.sum((x * y).reshape(-1, 8, LANES), axis=0)
        x_acc[...] += jnp.sum(x.reshape(-1, 8, LANES), axis=0)
        y_acc[...] += jnp.sum(y.reshape(-1, 8, LANES), axis=0)

    if n_chunks == 1:
        accumulate(x_ref[...], y_ref[...], row_base)
    else:
        # Bound f32 temporaries to one chunk regardless of block size.
        def chunk_body(c, carry):
            r0 = pl.multiple_of(c * chunk_rows, chunk_rows)
            accumulate(x_ref[pl.ds(r0, chunk_rows), :],
                       y_ref[pl.ds(r0, chunk_rows), :],
                       row_base + c * chunk_rows)
            return carry

        jax.lax.fori_loop(0, n_chunks, chunk_body, 0)

    @pl.when(i == pl.num_programs(0) - 1)
    def _finalize():
        tp = jnp.sum(xy_acc[...])
        # Wrapper-padded zeros contribute sigmoid(0)=0.5 each to sum(x);
        # subtract that deterministic amount instead of masking per element.
        sum_x = jnp.sum(x_acc[...]) - sum_x_correction
        sum_y = jnp.sum(y_acc[...])
        fp = sum_x - tp
        fn = sum_y - tp
        denom = (tp + alpha * fp) + beta * (tp + gamma * fn)
        # NOTE: matches the reference (module's self.epsilon is unused there).
        o_ref[0, 0] = 1.0 - (1.0 + beta) * tp / denom


def effectiveness_loss(x, y, *, alpha=1.0, beta=1.0, gamma=1.0,
                       apply_non_lin=True,
                       min_pallas_elements=MIN_PALLAS_ELEMENTS):
    """Pallas TPU equivalent of Effectiveness().forward(x, y)."""
    total = int(x.size)
    if total == 0 or total < min_pallas_elements:
        return _effectiveness_jax(x, y, alpha=alpha, beta=beta, gamma=gamma,
                                  apply_non_lin=apply_non_lin)

    itemsize = jnp.dtype(x.dtype).itemsize
    sublane_gran = 8 * max(1, 4 // itemsize)     # 8 f32 / 16 bf16 / 32 int8
    max_block_rows = MAX_BLOCK_BYTES // (LANES * itemsize)
    max_block_rows = max(CHUNK_ROWS, (max_block_rows // CHUNK_ROWS) * CHUNK_ROWS)

    lane_pad = (-total) % LANES
    rows = (total + lane_pad) // LANES           # rows of the (rows,128) view

    if rows < CHUNK_ROWS:
        # Single small block; round rows to the packed-sublane granularity of
        # the dtype.  The (tiny) pad copy is irrelevant at this size.
        row_pad = (-rows) % sublane_gran
        block_rows = rows + row_pad
        chunk_rows = block_rows
    else:
        # Large-input path: big lane-dense blocks, block_rows <= rows so the
        # last (possibly partial) block is handled with the in-kernel row
        # mask -- no wrapper-side padding for lane-aligned inputs.
        row_pad = 0
        block_rows = min(max_block_rows, (rows // CHUNK_ROWS) * CHUNK_ROWS)
        chunk_rows = CHUNK_ROWS

    array_rows = rows + row_pad
    pad_elems = lane_pad + row_pad * LANES
    n_tiles = pl.cdiv(array_rows, block_rows)
    mask_rows = (array_rows % block_rows) != 0

    x_flat = x.reshape(-1)
    y_flat = y.reshape(-1)
    if pad_elems > 0:
        # Only reached for lane-unaligned totals (rare for large tensors) or
        # tiny forced-kernel inputs.
        # TODO(synk): a 1-D-blocked kernel (or manual DMA) would avoid this
        # extra HBM pass for huge lane-unaligned inputs.
        x_flat = jnp.pad(x_flat, (0, pad_elems))
        y_flat = jnp.pad(y_flat, (0, pad_elems))
    x2d = x_flat.reshape(array_rows, LANES)      # free reshape when no pad
    y2d = y_flat.reshape(array_rows, LANES)

    sum_x_correction = 0.5 * pad_elems if (apply_non_lin and pad_elems) else 0.0

    kernel = functools.partial(
        _effectiveness_kernel,
        alpha=float(alpha), beta=float(beta), gamma=float(gamma),
        apply_non_lin=bool(apply_non_lin), chunk_rows=int(chunk_rows),
        valid_rows=int(array_rows), mask_rows=bool(mask_rows),
        sum_x_correction=float(sum_x_correction))

    # If xprof ever shows exposed DMA per step, pipeline_mode=pl.Buffered(3)
    # on the two input specs is a cheap follow-up experiment.
    out = pl.pallas_call(
        kernel,
        out_shape=jax.ShapeDtypeStruct((1, 1), jnp.float32),
        grid=(int(n_tiles),),
        in_specs=[
            pl.BlockSpec((block_rows, LANES), lambda i: (i, 0)),
            pl.BlockSpec((block_rows, LANES), lambda i: (i, 0)),
        ],
        out_specs=pl.BlockSpec(memory_space=pltpu.SMEM),
        scratch_shapes=[
            pltpu.VMEM((8, LANES), jnp.float32),
            pltpu.VMEM((8, LANES), jnp.float32),
            pltpu.VMEM((8, LANES), jnp.float32),
        ],
        compiler_params=pltpu.CompilerParams(
            dimension_semantics=("arbitrary",),
            # ~18 MiB peak (2 inputs x 2 bufs x 4 MiB + chunk temporaries);
            # raise above v5e's 16 MiB scoped default, stay below v7x's
            # 64 MiB physical VMEM.
            vmem_limit_bytes=32 * 1024 * 1024),
    )(x2d, y2d)
    return out[0, 0]


def _reference(x, y, alpha=1.0, beta=1.0, gamma=1.0, apply_non_lin=True):
    x = x.astype(jnp.float32)
    y = y.astype(jnp.float32)
    if apply_non_lin:
        x = jax.nn.sigmoid(x)
    tp = jnp.sum(x * y)
    fp = jnp.sum(x * (1.0 - y))
    fn = jnp.sum((1.0 - x) * y)
    p = tp / (tp + alpha * fp)
    r = tp / (tp + gamma * fn)
    return 1.0 - (1.0 + beta) / (1.0 / p + beta / r)


if __name__ == "__main__":
    # 1) Module-like case: NCHW logits + binary mask, lane-aligned, forced
    #    through the kernel path (default heuristic would use plain XLA).
    kx, ky = jax.random.split(jax.random.PRNGKey(0))
    x = jax.random.normal(kx, (2, 4, 16, 16), dtype=jnp.float32)
    y = (jax.random.uniform(ky, (2, 4, 16, 16)) > 0.5).astype(jnp.float32)
    loss = effectiveness_loss(x, y, min_pallas_elements=0)
    jax.block_until_ready(loss)
    ref = _reference(x, y)
    assert jnp.allclose(loss, ref, atol=1e-5, rtol=1e-5), (loss, ref)

    # 2) Multi-tile path with a ragged (masked) last block, default config.
    kx2, ky2 = jax.random.split(jax.random.PRNGKey(1))
    x2 = jax.random.normal(kx2, (2, 4, 96, 96), dtype=jnp.float32)
    y2 = (jax.random.uniform(ky2, (2, 4, 96, 96)) > 0.5).astype(jnp.float32)
    loss2 = effectiveness_loss(x2, y2)
    jax.block_until_ready(loss2)
    ref2 = _reference(x2, y2)
    assert jnp.allclose(loss2, ref2, atol=1e-5, rtol=1e-5), (loss2, ref2)

    # 3) Lane-unaligned case (exercises pad + sigmoid(0) correction).
    kx3, ky3 = jax.random.split(jax.random.PRNGKey(2))
    x3 = jax.random.normal(kx3, (3, 5, 17, 13), dtype=jnp.float32)
    y3 = (jax.random.uniform(ky3, (3, 5, 17, 13)) > 0.5).astype(jnp.float32)
    loss3 = effectiveness_loss(x3, y3, min_pallas_elements=0)
    jax.block_until_ready(loss3)
    ref3 = _reference(x3, y3)
    assert jnp.allclose(loss3, ref3, atol=1e-5, rtol=1e-5), (loss3, ref3)

    print("KERNEL_OK")
</pallas_src>

<mosaic_0001>
module attributes {stable_mosaic.version = 11 : i64} {
  func.func @_effectiveness_kernel(%arg0: i32, %arg1: memref<16x128xf32, #tpu.memory_space<vmem>>, %arg2: memref<16x128xf32, #tpu.memory_space<vmem>>, %arg3: memref<1x1xf32, #tpu.memory_space<smem>>, %arg4: memref<8x128xf32, #tpu.memory_space<vmem>>, %arg5: memref<8x128xf32, #tpu.memory_space<vmem>>, %arg6: memref<8x128xf32, #tpu.memory_space<vmem>>) attributes {dimension_semantics = [#tpu.dimension_semantics<arbitrary>], iteration_bounds = array<i64: 1>, scalar_prefetch = 0 : i64, scratch_operands = 3 : i64, tpu.core_type = #tpu.core_type<tc>, window_params = [{transform_indices = @transform_0, window_bounds = array<i64: 16, 128>}, {transform_indices = @transform_1, window_bounds = array<i64: 16, 128>}, {transform_indices = @transform_2, window_bounds = array<i64: 1, 1>}]} {
    %c0_i32 = arith.constant 0 : i32
    %0 = arith.cmpi eq, %arg0, %c0_i32 : i32
    %1 = arith.extui %0 : i1 to i32
    %c0_i32_0 = arith.constant 0 : i32
    %2 = arith.cmpi ne, %1, %c0_i32_0 : i32
    scf.if %2 {
      %cst_23 = arith.constant 0.000000e+00 : f32
      %31 = vector.broadcast %cst_23 : f32 to vector<8x128xf32>
      %c0_24 = arith.constant 0 : index
      %c0_25 = arith.constant 0 : index
      %32 = vector.load %arg4[%c0_24, %c0_25] : memref<8x128xf32, #tpu.memory_space<vmem>>, vector<8x128xf32>
      tpu.vector_store %arg4[%c0_24, %c0_25], %31 {strides = array<i32>} : memref<8x128xf32, #tpu.memory_space<vmem>>, vector<8x128xf32>,
      %cst_26 = arith.constant 0.000000e+00 : f32
      %33 = vector.broadcast %cst_26 : f32 to vector<8x128xf32>
      %c0_27 = arith.constant 0 : index
      %c0_28 = arith.constant 0 : index
      %34 = vector.load %arg5[%c0_27, %c0_28] : memref<8x128xf32, #tpu.memory_space<vmem>>, vector<8x128xf32>
      tpu.vector_store %arg5[%c0_27, %c0_28], %33 {strides = array<i32>} : memref<8x128xf32, #tpu.memory_space<vmem>>, vector<8x128xf32>,
      %cst_29 = arith.constant 0.000000e+00 : f32
      %35 = vector.broadcast %cst_29 : f32 to vector<8x128xf32>
      %c0_30 = arith.constant 0 : index
      %c0_31 = arith.constant 0 : index
      %36 = vector.load %arg6[%c0_30, %c0_31] : memref<8x128xf32, #tpu.memory_space<vmem>>, vector<8x128xf32>
      tpu.vector_store %arg6[%c0_30, %c0_31], %35 {strides = array<i32>} : memref<8x128xf32, #tpu.memory_space<vmem>>, vector<8x128xf32>,
    } else {
    }
    %c0 = arith.constant 0 : index
    %c0_1 = arith.constant 0 : index
    %3 = vector.load %arg1[%c0, %c0_1] : memref<16x128xf32, #tpu.memory_space<vmem>>, vector<16x128xf32>
    %c0_2 = arith.constant 0 : index
    %c0_3 = arith.constant 0 : index
    %4 = vector.load %arg2[%c0_2, %c0_3] : memref<16x128xf32, #tpu.memory_space<vmem>>, vector<16x128xf32>
    %cst = arith.constant 5.000000e-01 : f32
    %5 = vector.broadcast %cst : f32 to vector<16x128xf32>
    %6 = arith.mulf %5, %3 : vector<16x128xf32>
    %7 = math.tanh %6 : vector<16x128xf32>
    %cst_4 = arith.constant 5.000000e-01 : f32
    %8 = vector.broadcast %cst_4 : f32 to vector<16x128xf32>
    %9 = arith.mulf %8, %7 : vector<16x128xf32>
    %cst_5 = arith.constant 5.000000e-01 : f32
    %10 = vector.broadcast %cst_5 : f32 to vector<16x128xf32>
    %11 = arith.addf %9, %10 : vector<16x128xf32>
    %c0_6 = arith.constant 0 : index
    %c0_7 = arith.constant 0 : index
    %12 = vector.load %arg4[%c0_6, %c0_7] : memref<8x128xf32, #tpu.memory_space<vmem>>, vector<8x128xf32>
    %13 = arith.mulf %11, %4 : vector<16x128xf32>
    %14 = vector.shape_cast %13 : vector<16x128xf32> to vector<2x8x128xf32>
    %cst_8 = arith.constant dense<0.000000e+00> : vector<8x128xf32>
    %15 = vector.multi_reduction <add>, %14, %cst_8 [0] : vector<2x8x128xf32> to vector<8x128xf32>
    %16 = arith.addf %12, %15 : vector<8x128xf32>
    %c0_9 = arith.constant 0 : index
    %c0_10 = arith.constant 0 : index
    %17 = vector.load %arg4[%c0_9, %c0_10] : memref<8x128xf32, #tpu.memory_space<vmem>>, vector<8x128xf32>
    tpu.vector_store %arg4[%c0_9, %c0_10], %16 {strides = array<i32>} : memref<8x128xf32, #tpu.memory_space<vmem>>, vector<8x128xf32>,
    %c0_11 = arith.constant 0 : index
    %c0_12 = arith.constant 0 : index
    %18 = vector.load %arg5[%c0_11, %c0_12] : memref<8x128xf32, #tpu.memory_space<vmem>>, vector<8x128xf32>
    %19 = vector.shape_cast %11 : vector<16x128xf32> to vector<2x8x128xf32>
    %cst_13 = arith.constant dense<0.000000e+00> : vector<8x128xf32>
    %20 = vector.multi_reduction <add>, %19, %cst_13 [0] : vector<2x8x128xf32> to vector<8x128xf32>
    %21 = arith.addf %18, %20 : vector<8x128xf32>
    %c0_14 = arith.constant 0 : index
    %c0_15 = arith.constant 0 : index
    %22 = vector.load %arg5[%c0_14, %c0_15] : memref<8x128xf32, #tpu.memory_space<vmem>>, vector<8x128xf32>
    tpu.vector_store %arg5[%c0_14, %c0_15], %21 {strides = array<i32>} : memref<8x128xf32, #tpu.memory_space<vmem>>, vector<8x128xf32>,
    %c0_16 = arith.constant 0 : index
    %c0_17 = arith.constant 0 : index
    %23 = vector.load %arg6[%c0_16, %c0_17] : memref<8x128xf32, #tpu.memory_space<vmem>>, vector<8x128xf32>
    %24 = vector.shape_cast %4 : vector<16x128xf32> to vector<2x8x128xf32>
    %cst_18 = arith.constant dense<0.000000e+00> : vector<8x128xf32>
    %25 = vector.multi_reduction <add>, %24, %cst_18 [0] : vector<2x8x128xf32> to vector<8x128xf32>
    %26 = arith.addf %23, %25 : vector<8x128xf32>
    %c0_19 = arith.constant 0 : index
    %c0_20 = arith.constant 0 : index
    %27 = vector.load %arg6[%c0_19, %c0_20] : memref<8x128xf32, #tpu.memory_space<vmem>>, vector<8x128xf32>
    tpu.vector_store %arg6[%c0_19, %c0_20], %26 {strides = array<i32>} : memref<8x128xf32, #tpu.memory_space<vmem>>, vector<8x128xf32>,
    %c0_i32_21 = arith.constant 0 : i32
    %28 = arith.cmpi eq, %arg0, %c0_i32_21 : i32
    %29 = arith.extui %28 : i1 to i32
    %c0_i32_22 = arith.constant 0 : i32
    %30 = arith.cmpi ne, %29, %c0_i32_22 : i32
    scf.if %30 {
      %c0_23 = arith.constant 0 : index
      %c0_24 = arith.constant 0 : index
      %31 = vector.load %arg4[%c0_23, %c0_24] : memref<8x128xf32, #tpu.memory_space<vmem>>, vector<8x128xf32>
      %32 = vector.shape_cast %31 : vector<8x128xf32> to vector<1x8x128xf32>
      %cst_25 = arith.constant dense<0.000000e+00> : vector<1xf32>
      %33 = vector.multi_reduction <add>, %32, %cst_25 [1, 2] : vector<1x8x128xf32> to vector<1xf32>
      %34 = vector.shape_cast %33 : vector<1xf32> to vector<1x1x1xf32>
      %35 = vector.extract %34[0, 0, 0] : f32 from vector<1x1x1xf32>
      %c0_26 = arith.constant 0 : index
      %c0_27 = arith.constant 0 : index
      %36 = vector.load %arg5[%c0_26, %c0_27] : memref<8x128xf32, #tpu.memory_space<vmem>>, vector<8x128xf32>
      %37 = vector.shape_cast %36 : vector<8x128xf32> to vector<1x8x128xf32>
      %cst_28 = arith.constant dense<0.000000e+00> : vector<1xf32>
      %38 = vector.multi_reduction <add>, %37, %cst_28 [1, 2] : vector<1x8x128xf32> to vector<1xf32>
      %39 = vector.shape_cast %38 : vector<1xf32> to vector<1x1x1xf32>
      %40 = vector.extract %39[0, 0, 0] : f32 from vector<1x1x1xf32>
      %cst_29 = arith.constant 0.000000e+00 : f32
      %41 = arith.subf %40, %cst_29 : f32
      %c0_30 = arith.constant 0 : index
      %c0_31 = arith.constant 0 : index
      %42 = vector.load %arg6[%c0_30, %c0_31] : memref<8x128xf32, #tpu.memory_space<vmem>>, vector<8x128xf32>
      %43 = vector.shape_cast %42 : vector<8x128xf32> to vector<1x8x128xf32>
      %cst_32 = arith.constant dense<0.000000e+00> : vector<1xf32>
      %44 = vector.multi_reduction <add>, %43, %cst_32 [1, 2] : vector<1x8x128xf32> to vector<1xf32>
      %45 = vector.shape_cast %44 : vector<1xf32> to vector<1x1x1xf32>
      %46 = vector.extract %45[0, 0, 0] : f32 from vector<1x1x1xf32>
      %47 = arith.subf %41, %35 : f32
      %48 = arith.subf %46, %35 : f32
      %cst_33 = arith.constant 1.000000e+00 : f32
      %49 = arith.mulf %cst_33, %47 : f32
      %50 = arith.addf %35, %49 : f32
      %cst_34 = arith.constant 1.000000e+00 : f32
      %51 = arith.mulf %cst_34, %48 : f32
      %52 = arith.addf %35, %51 : f32
      %cst_35 = arith.constant 1.000000e+00 : f32
      %53 = arith.mulf %cst_35, %52 : f32
      %54 = arith.addf %50, %53 : f32
      %cst_36 = arith.constant 2.000000e+00 : f32
      %55 = arith.mulf %cst_36, %35 : f32
      %56 = arith.divf %55, %54 : f32
      %cst_37 = arith.constant 1.000000e+00 : f32
      %57 = arith.subf %cst_37, %56 : f32
      %c0_38 = arith.constant 0 : index
      %c0_39 = arith.constant 0 : index
      %58 = memref.load %arg3[%c0_38, %c0_39] : memref<1x1xf32, #tpu.memory_space<smem>>
      memref.store %57, %arg3[%c0_38, %c0_39] : memref<1x1xf32, #tpu.memory_space<smem>>
    } else {
    }
    return
  }
  func.func @transform_0(%arg0: i32) -> (i32, i32) {
    %c0_i32 = arith.constant 0 : i32
    %c0_i32_0 = arith.constant 0 : i32
    return %arg0, %c0_i32 : i32, i32
  }
  func.func @transform_1(%arg0: i32) -> (i32, i32) {
    %c0_i32 = arith.constant 0 : i32
    %c0_i32_0 = arith.constant 0 : i32
    return %arg0, %c0_i32 : i32, i32
  }
  func.func @transform_2(%arg0: i32) -> (i32, i32) {
    %c0_i32 = arith.constant 0 : i32
    %c0_i32_0 = arith.constant 0 : i32
    %c0_i32_1 = arith.constant 0 : i32
    return %c0_i32, %c0_i32_0 : i32, i32
  }
}

</mosaic_0001>

<llo_original>
// kernel: tpu_custom_call.1
$region0: #{tpu_custom_call.1}
  #allocation0 [shape = 'u32[]', space=smem, size = 0x4, offset = 0x4, fixed_abs, tag = 'smem constant byte address 0x4 - core index']
  #allocation1 [shape = 'u32[144,128]{1,0:T(1,128)}', space=vmem, size = 0x12000, scoped, tag = 'internal scratch']
  #allocation2 [shape = 'f32[8,128]{1,0:T(8,128)}', space=vmem, size = 0x1000, scoped, tag = 'scratch operand']
  #allocation3 [shape = 'f32[8,128]{1,0:T(8,128)}', space=vmem, size = 0x1000, scoped, tag = 'scratch operand']
  #allocation4 [shape = 'f32[8,128]{1,0:T(8,128)}', space=vmem, size = 0x1000, scoped, tag = 'scratch operand']
  %s0 = inlined_call_operand.hbm [shape: f32[16,128], index: 0, kind: input, shape index: {}]
  %s1 = inlined_call_operand.hbm [shape: f32[16,128], index: 1, kind: input, shape index: {}]
  %s2 = inlined_call_operand.hbm [shape: f32[1,1], index: 2, kind: output, shape index: {}]
  %s3 = sld [smem:[#allocation0]]
  $region34: #{tpu_custom_call.1} parent=0
    _
  %s5 = ssub.s32 1, %s3
  %s6 = scalar_select 0, %s5, %s3
  $region1: #{tpu_custom_call.1} parent=0
    #allocation5 [shape = 'u8[8192]{0}', space=vmem, size = 0x2000, scoped, tag = 'input window, operand 0, single buffered']
    #allocation6 [shape = 's32[1]{0}', space=sflag, size = 0x4, scoped, tag = 'scoped memory for tpu_custom_call.1']
    #allocation7 [shape = 's32[1]{0}', space=sflag, size = 0x4, scoped, tag = 'scoped memory for tpu_custom_call.1']
    #allocation8 [shape = 'u8[8192]{0}', space=vmem, size = 0x2000, scoped, tag = 'input window, operand 1, single buffered']
    #allocation9 [shape = 's32[1]{0}', space=sflag, size = 0x4, scoped, tag = 'scoped memory for tpu_custom_call.1']
    #allocation10 [shape = 'u8[512]{0}', space=smem, size = 0x200, scoped, tag = 'output window, operand 0, single buffered']
    %7 = vsyncpa [#allocation6], 0
    %8 = vsyncpa [#allocation9], 0
    %9 = vsyncpa [#allocation7], 0
    // Predicated region
    $region2: #{tpu_custom_call.1} parent=1 // pred_check
      _
    $region3: #{tpu_custom_call.1} parent=1 // pred_check_branch
      %11 = sbr.rel (0) target = $region5
    $region4: #{tpu_custom_call.1} parent=1 // pred_region
      %s13 = ssub.s32 256, 256
      %14 = vsyncadd [#allocation6], %s13
      %s15 = sshll.u32 [#allocation5], 4
      %s16 = int_to_ptr.vmem [resolvable:$true] %s15
      %21 = dma.hbm_to_vmem [thread:$0]  %s0, 256, %s16, [#allocation6], 128, 128, 8
    $region5: #{tpu_custom_call.1} parent=1 // pred_fallthru
      _
    // Predicated region
    $region6: #{tpu_custom_call.1} parent=1 // pred_check
      _
    $region7: #{tpu_custom_call.1} parent=1 // pred_check_branch
      %23 = sbr.rel (0) target = $region9
    $region8: #{tpu_custom_call.1} parent=1 // pred_region
      %s25 = ssub.s32 256, 256
      %26 = vsyncadd [#allocation9], %s25
      %s27 = sshll.u32 [#allocation8], 4
      %s28 = int_to_ptr.vmem [resolvable:$true] %s27
      %33 = dma.hbm_to_vmem [thread:$0]  %s1, 256, %s28, [#allocation9], 128, 128, 8
    $region9: #{tpu_custom_call.1} parent=1 // pred_fallthru
      _
    // Predicated region
    $region10: #{tpu_custom_call.1} parent=1 // pred_check
      _
    $region11: #{tpu_custom_call.1} parent=1 // pred_check_branch
      %35 = sbr.rel (0) target = $region13
    $region12: #{tpu_custom_call.1} parent=1 // pred_region
      %36 = dma.done [#allocation6], 256
    $region13: #{tpu_custom_call.1} parent=1 // pred_fallthru
      _
    // Predicated region
    $region14: #{tpu_custom_call.1} parent=1 // pred_check
      _
    $region15: #{tpu_custom_call.1} parent=1 // pred_check_branch
      %38 = sbr.rel (0) target = $region17
    $region16: #{tpu_custom_call.1} parent=1 // pred_region
      %39 = dma.done [#allocation9], 256
    $region17: #{tpu_custom_call.1} parent=1 // pred_fallthru
      _
    %p40 = scmp.eq.s32.totalorder 0, 0
    // Predicated region
    $region18: #{tpu_custom_call.1} parent=1 // pred_check
      %p41 = pneg %p40
    $region19: #{tpu_custom_call.1} parent=1 // pred_check_branch
      %43 = sbr.rel (%p41) target = $region21
    $region20: #{tpu_custom_call.1} parent=1 // pred_region
      %44 = vst [vmem:[#allocation2] sm:$0xff] 0.0
      %45 = vst [vmem:[#allocation3] sm:$0xff] 0.0
      %46 = vst [vmem:[#allocation4] sm:$0xff] 0.0
    $region21: #{tpu_custom_call.1} parent=1 // pred_fallthru
      _
    %v47 = vld [vmem:[#allocation5] sm:$0xff]
    %v48 = vld [vmem:[#allocation5 + $0x8] sm:$0xff]
    %v49 = vld [vmem:[#allocation8] sm:$0xff]
    %v50 = vld [vmem:[#allocation8 + $0x8] sm:$0xff]
    %v51 = vmul.f32 %v47, 0.5
    %v52 = vmul.f32 %v48, 0.5
    %v53 = vtanh.pop %v51
    %v54 = vtanh.pop %v52
    %v55 = vmul.f32 %v53, 0.5
    %v56 = vmul.f32 %v54, 0.5
    %v57 = vadd.f32 %v55, 0.5
    %v58 = vadd.f32 %v56, 0.5
    %v59 = vld [vmem:[#allocation2] sm:$0xff]
    %v60 = vmul.f32 %v57, %v49
    %v61 = vmul.f32 %v58, %v50
    %v62 = vadd.f32 %v60, %v61
    %v63 = vadd.f32 %v59, %v62
    %64 = vst [vmem:[#allocation2] sm:$0xff] %v63
    %v65 = vld [vmem:[#allocation3] sm:$0xff]
    %v66 = vadd.f32 %v57, %v58
    %v67 = vadd.f32 %v65, %v66
    %68 = vst [vmem:[#allocation3] sm:$0xff] %v67
    %v69 = vld [vmem:[#allocation4] sm:$0xff]
    %v70 = vadd.f32 %v49, %v50
    %v71 = vadd.f32 %v69, %v70
    %72 = vst [vmem:[#allocation4] sm:$0xff] %v71
    // Predicated region
    $region22: #{tpu_custom_call.1} parent=1 // pred_check
      %p73 = pneg %p40
    $region23: #{tpu_custom_call.1} parent=1 // pred_check_branch
      %75 = sbr.rel (%p73) target = $region25
    $region24: #{tpu_custom_call.1} parent=1 // pred_region
      %v76 = vld [vmem:[#allocation2] sm:$0xff]
      %77 = vadd.xlane.f32.xlu0 %v76
      %v78 = vpop.xlane.xlu0 %77
      %v79 = vrot.slane %v78, 4
      %v80 = vadd.f32 %v78, %v79
      %v81 = vrot.slane %v80, 2
      %v82 = vadd.f32 %v80, %v81
      %v83 = vrot.slane %v82, 1
      %v84 = vadd.f32 %v82, %v83
      %s85 = vtos %v84
      %v86 = vld [vmem:[#allocation3] sm:$0xff]
      %87 = vadd.xlane.f32.xlu0 %v86
      %v88 = vpop.xlane.xlu0 %87
      %v89 = vrot.slane %v88, 4
      %v90 = vadd.f32 %v88, %v89
      %v91 = vrot.slane %v90, 2
      %v92 = vadd.f32 %v90, %v91
      %v93 = vrot.slane %v92, 1
      %v94 = vadd.f32 %v92, %v93
      %s95 = vtos %v94
      %v96 = vld [vmem:[#allocation4] sm:$0xff]
      %97 = vadd.xlane.f32.xlu0 %v96
      %v98 = vpop.xlane.xlu0 %97
      %v99 = vrot.slane %v98, 4
      %v100 = vadd.f32 %v98, %v99
      %v101 = vrot.slane %v100, 2
      %v102 = vadd.f32 %v100, %v101
      %v103 = vrot.slane %v102, 1
      %v104 = vadd.f32 %v102, %v103
      %s105 = vtos %v104
      %s106 = ssub.f32 %s95, %s85
      %s107 = ssub.f32 %s105, %s85
      %s108 = sadd.f32 %s85, %s106
      %s109 = sadd.f32 %s85, %s107
      %s110 = sadd.f32 %s108, %s109
      %s111 = smul.f32 %s85, 2.0
      %v112 = vstv %s110
      %v113 = vrcp.pop %v112
      %s114 = vtos %v113
      %s115 = smul.f32 %s111, %s114
      %s116 = ssub.f32 1.0, %s115
      %s117 = scalar_lea.smem [#allocation10], 0
      %118 = sst [smem:[%s117]] %s116
    $region25: #{tpu_custom_call.1} parent=1 // pred_fallthru
      _
    // Predicated region
    $region26: #{tpu_custom_call.1} parent=1 // pred_check
      _
    $region27: #{tpu_custom_call.1} parent=1 // pred_check_branch
      %120 = sbr.rel (0) target = $region29
    $region28: #{tpu_custom_call.1} parent=1 // pred_region
      %s122 = ssub.s32 16, 16
      %123 = vsyncadd [#allocation7], %s122
      %126 = dma.smem_to_hbm [#allocation10], 16, %s2, [#allocation7]
    $region29: #{tpu_custom_call.1} parent=1 // pred_fallthru
      _
    // Predicated region
    $region30: #{tpu_custom_call.1} parent=1 // pred_check
      _
    $region31: #{tpu_custom_call.1} parent=1 // pred_check_branch
      %128 = sbr.rel (0) target = $region33
    $region32: #{tpu_custom_call.1} parent=1 // pred_region
      %129 = dma.done [#allocation7], 16
    $region33: #{tpu_custom_call.1} parent=1 // pred_fallthru
      _
    %130 = sfence
    %131 = vsyncpa [#allocation6], 1
    %132 = vsyncpa [#allocation9], 1
    %133 = vsyncpa [#allocation7], 1

</llo_original>
